<compile_context>
chip_gen: v6e
topology: v6e:2x2x1
jax: 0.10.0
libtpu: 0.0.40
codegen_flags: <defaults>
</compile_context>

<pallas_src>
import functools

import jax
import jax.numpy as jnp
from jax.experimental import pallas as pl
from jax.experimental.pallas import tpu as pltpu

# ---- small, module-consistent hyper-parameters ----
B = 2
IN_CH = 4
IMG = 16
PATCH = 4
EMBED = 128                       # multiple of 128 -> lane-dense output
HP = IMG // PATCH                 # 4
N_PATCHES = HP * HP               # 16


def patch_embed_kernel(p_ref, w_ref, b_ref, o_ref):
    # p_ref: (tm, K)  w_ref: (K, E)  b_ref: (1, E)  o_ref: (tm, E)
    o_ref[...] = (
        jnp.dot(
            p_ref[...],
            w_ref[...],
            preferred_element_type=jnp.float32,
            precision=jax.lax.Precision.HIGHEST,
        )
        + b_ref[...]
    )


def prepare_patch_embed_params(conv_w, conv_b):
    """One-time parameter preprocessing (hoisted out of the per-forward path)."""
    e = conv_w.shape[0]
    k = conv_w.shape[1] * conv_w.shape[2] * conv_w.shape[3]
    w2d = jnp.asarray(conv_w).reshape(e, k).T     # (K, E): kernel does patches @ w2d
    b2d = jnp.asarray(conv_b).reshape(1, e)       # (1, E)
    return w2d, b2d


@functools.partial(jax.jit, static_argnames=("patch",))
def patch_embedding(x, w2d, b2d, *, patch):
    """x: (B, Cin, H, W); w2d: (K, E); b2d: (1, E) -> (B, n_patches, E)."""
    b_, cin, himg, wimg = x.shape
    k, e = w2d.shape
    hp, wp = himg // patch, wimg // patch
    n_patches = hp * wp
    m = b_ * n_patches

    # im2col: layout-only.  Row order (b, hp, wp) and per-patch flattening (c, ph, pw)
    # match PyTorch Conv2d + flatten(2) + transpose(1, 2).  Kept in the same jit and
    # fused into the Mosaic call via allow_input_fusion.
    patches = x.reshape(b_, cin, hp, patch, wp, patch)
    patches = patches.transpose(0, 2, 4, 1, 3, 5).reshape(m, k)

    # M tiling: one big block at toy sizes; 256-row tiles (multiple of 8, MXU-friendly,
    # comfortably inside every generation's VMEM budget with resident (K,E) weights)
    # once M grows.  "parallel" lets v7x spread steps over both TensorCores.
    tm = m if m <= 512 else 256
    grid_m = pl.cdiv(m, tm)

    out = pl.pallas_call(
        patch_embed_kernel,
        out_shape=jax.ShapeDtypeStruct((m, e), jnp.float32),
        grid=(grid_m,),
        in_specs=[
            pl.BlockSpec((tm, k), lambda i: (i, 0)),   # patch rows, tiled over M
            pl.BlockSpec((k, e), lambda i: (0, 0)),    # weight, resident
            pl.BlockSpec((1, e), lambda i: (0, 0)),    # bias, resident
        ],
        out_specs=pl.BlockSpec((tm, e), lambda i: (i, 0)),
        compiler_params=pltpu.CompilerParams(
            dimension_semantics=("parallel",),
            # Let XLA fold the im2col transpose (producer of operand 0) into the
            # Mosaic call; weight/bias are already plain parameters.
            allow_input_fusion=[True, False, False],
        ),
    )(patches, w2d, b2d)

    return out.reshape(b_, n_patches, e)


if __name__ == "__main__":
    key = jax.random.PRNGKey(0)
    kx, kw, kb = jax.random.split(key, 3)
    x = jax.random.normal(kx, (B, IN_CH, IMG, IMG), jnp.float32)
    conv_w = 0.02 * jax.random.normal(kw, (EMBED, IN_CH, PATCH, PATCH), jnp.float32)
    conv_b = 0.01 * jax.random.normal(kb, (EMBED,), jnp.float32)

    # One-time param prep (the "module init"), not part of the forward pass.
    w2d, b2d = prepare_patch_embed_params(conv_w, conv_b)

    out = patch_embedding(x, w2d, b2d, patch=PATCH)
    out = jax.block_until_ready(out)
    assert out.shape == (B, N_PATCHES, EMBED) and out.dtype == jnp.float32

    # Reference: the actual strided conv -> flatten -> transpose, in f32/HIGHEST.
    ref = jax.lax.conv_general_dilated(
        x, conv_w, window_strides=(PATCH, PATCH), padding="VALID",
        dimension_numbers=("NCHW", "OIHW", "NCHW"),
        precision=jax.lax.Precision.HIGHEST)
    ref = ref.reshape(B, EMBED, N_PATCHES).transpose(0, 2, 1) + conv_b.reshape(1, 1, EMBED)
    assert jnp.allclose(out, ref, atol=1e-3, rtol=1e-3)

    print("KERNEL_OK")
</pallas_src>

<mosaic_0001>
module attributes {stable_mosaic.version = 11 : i64} {
  func.func @patch_embed_kernel(%arg0: i32, %arg1: memref<32x64xf32, #tpu.memory_space<vmem>>, %arg2: memref<64x128xf32, #tpu.memory_space<vmem>>, %arg3: memref<1x128xf32, #tpu.memory_space<vmem>>, %arg4: memref<32x128xf32, #tpu.memory_space<vmem>>) attributes {dimension_semantics = [#tpu.dimension_semantics<parallel>], iteration_bounds = array<i64: 1>, scalar_prefetch = 0 : i64, scratch_operands = 0 : i64, tpu.core_type = #tpu.core_type<tc>, window_params = [{transform_indices = @transform_0, window_bounds = array<i64: 32, 64>}, {pipeline_mode = #tpu.pipeline_mode<synchronous>, transform_indices = @transform_1, window_bounds = array<i64: 64, 128>}, {pipeline_mode = #tpu.pipeline_mode<synchronous>, transform_indices = @transform_2, window_bounds = array<i64: 1, 128>}, {transform_indices = @transform_3, window_bounds = array<i64: 32, 128>}]} {
    %c0 = arith.constant 0 : index
    %c0_0 = arith.constant 0 : index
    %0 = vector.load %arg1[%c0, %c0_0] : memref<32x64xf32, #tpu.memory_space<vmem>>, vector<32x64xf32>
    %c0_1 = arith.constant 0 : index
    %c0_2 = arith.constant 0 : index
    %1 = vector.load %arg2[%c0_1, %c0_2] : memref<64x128xf32, #tpu.memory_space<vmem>>, vector<64x128xf32>
    %cst = arith.constant dense<0.000000e+00> : vector<32x128xf32>
    %2 = tpu.matmul %0, %1, %cst {dimension_numbers = #tpu.dot_dimension_numbers<[1], [0], [0], [1], [0, 0, 1, 1], [], []>, precision = #tpu.contract_precision<fp32>} : vector<32x64xf32>, vector<64x128xf32>, vector<32x128xf32> -> vector<32x128xf32>
    %c0_3 = arith.constant 0 : index
    %c0_4 = arith.constant 0 : index
    %3 = vector.load %arg3[%c0_3, %c0_4] : memref<1x128xf32, #tpu.memory_space<vmem>>, vector<1x128xf32>
    %4 = vector.broadcast %3 : vector<1x128xf32> to vector<32x128xf32>
    %5 = arith.addf %2, %4 : vector<32x128xf32>
    %c0_5 = arith.constant 0 : index
    %c0_6 = arith.constant 0 : index
    %6 = vector.load %arg4[%c0_5, %c0_6] : memref<32x128xf32, #tpu.memory_space<vmem>>, vector<32x128xf32>
    tpu.vector_store %arg4[%c0_5, %c0_6], %5 {strides = array<i32>} : memref<32x128xf32, #tpu.memory_space<vmem>>, vector<32x128xf32>,
    return
  }
  func.func @transform_0(%arg0: i32) -> (i32, i32) {
    %c0_i32 = arith.constant 0 : i32
    %c0_i32_0 = arith.constant 0 : i32
    return %arg0, %c0_i32 : i32, i32
  }
  func.func @transform_1(%arg0: i32) -> (i32, i32) {
    %c0_i32 = arith.constant 0 : i32
    %c0_i32_0 = arith.constant 0 : i32
    %c0_i32_1 = arith.constant 0 : i32
    return %c0_i32, %c0_i32_0 : i32, i32
  }
  func.func @transform_2(%arg0: i32) -> (i32, i32) {
    %c0_i32 = arith.constant 0 : i32
    %c0_i32_0 = arith.constant 0 : i32
    %c0_i32_1 = arith.constant 0 : i32
    return %c0_i32, %c0_i32_0 : i32, i32
  }
  func.func @transform_3(%arg0: i32) -> (i32, i32) {
    %c0_i32 = arith.constant 0 : i32
    %c0_i32_0 = arith.constant 0 : i32
    return %arg0, %c0_i32 : i32, i32
  }
}

</mosaic_0001>

<llo_original>
// kernel: patch_embedding.1
$region0: #{patch_embedding.1}
  #allocation0 [shape = 'u32[]', space=smem, size = 0x4, offset = 0x4, fixed_abs, tag = 'smem constant byte address 0x4 - core index']
  #allocation1 [shape = 'u32[144,128]{1,0:T(1,128)}', space=vmem, size = 0x12000, scoped, tag = 'internal scratch']
  %s0 = inlined_call_operand.vmem [shape: f32[32,64], index: 0, kind: input, shape index: {}]
  %s1 = inlined_call_operand.vmem [shape: f32[64,128], index: 1, kind: input, shape index: {}]
  %s2 = inlined_call_operand.vmem [shape: f32[1,128], index: 2, kind: input, shape index: {}]
  %s3 = inlined_call_operand.hbm [shape: f32[32,128], index: 3, kind: output, shape index: {}]
  %s4 = sld [smem:[#allocation0]]
  $region22: #{patch_embedding.1} parent=0
    _
  %s6 = ssub.s32 1, %s4
  %s7 = scalar_select 0, %s6, %s4
  $region1: #{patch_embedding.1} parent=0
    #allocation2 [shape = 'u8[16384]{0}', space=vmem, size = 0x4000, scoped, tag = 'output window, operand 0, single buffered']
    #allocation3 [shape = 's32[1]{0}', space=sflag, size = 0x4, scoped, tag = 'scoped memory for patch_embedding.1']
    %8 = vsyncpa [#allocation3], 0
    // Predicated region
    $region2: #{patch_embedding.1} parent=1 // pred_check
      _
    $region3: #{patch_embedding.1} parent=1 // pred_check_branch
      %10 = sbr.rel (0) target = $region5
    $region4: #{patch_embedding.1} parent=1 // pred_region
      _
    $region5: #{patch_embedding.1} parent=1 // pred_fallthru
      _
    // Predicated region
    $region6: #{patch_embedding.1} parent=1 // pred_check
      _
    $region7: #{patch_embedding.1} parent=1 // pred_check_branch
      %12 = sbr.rel (0) target = $region9
    $region8: #{patch_embedding.1} parent=1 // pred_region
      _
    $region9: #{patch_embedding.1} parent=1 // pred_fallthru
      _
    // Predicated region
    $region10: #{patch_embedding.1} parent=1 // pred_check
      _
    $region11: #{patch_embedding.1} parent=1 // pred_check_branch
      %14 = sbr.rel (0) target = $region13
    $region12: #{patch_embedding.1} parent=1 // pred_region
      _
    $region13: #{patch_embedding.1} parent=1 // pred_fallthru
      _
    %v15 = vld [vmem:[%s0] sm:$0xff]
    %v16 = vld [vmem:[%s0 + $0x8] sm:$0xff]
    %v17 = vld [vmem:[%s0 + $0x10] sm:$0xff]
    %v18 = vld [vmem:[%s0 + $0x18] sm:$0xff]
    %v19 = vld [vmem:[%s1] sm:$0xff]
    %v20 = vld [vmem:[%s1 + $0x8] sm:$0xff]
    %v21 = vld [vmem:[%s1 + $0x10] sm:$0xff]
    %v22 = vld [vmem:[%s1 + $0x18] sm:$0xff]
    %v23 = vld [vmem:[%s1 + $0x20] sm:$0xff]
    %v24 = vld [vmem:[%s1 + $0x28] sm:$0xff]
    %v25 = vld [vmem:[%s1 + $0x30] sm:$0xff]
    %v26 = vld [vmem:[%s1 + $0x38] sm:$0xff]
    %v27 = vld [vmem:[%s2] sm:$0x1]
    %v29 = vlaneseq
    %v30 = vshrl.u32 %v29, 7
    %v31 = vsub.s32 0, %v30
    %v32 = vrot.slane %v27, %v31
    %vm34 = vcmask 523264
    %v36 = vsel %vm34, %v15, 0
    %v39 = vsel %vm34, %v16, 0
    %v42 = vsel %vm34, %v17, 0
    %v45 = vsel %vm34, %v18, 0
    %47 = vmatprep.subr.mxu0 0.0
    %48 = vmatpush1.msra.mxu0 0.0
    %49 = vmatprep.subr.mxu0 0.0
    %50 = vmatpush1.msra.mxu0 0.0
    %51 = vmatprep.subr.mxu0 0.0
    %52 = vmatpush1.msra.mxu0 0.0
    %53 = vmatprep.subr.mxu0 0.0
    %54 = vmatpush1.msra.mxu0 0.0
    %55 = vmatprep.subr.mxu0 0.0
    %56 = vmatpush1.msra.mxu0 0.0
    %57 = vmatprep.subr.mxu0 0.0
    %58 = vmatpush1.msra.mxu0 0.0
    %59 = vmatprep.subr.mxu0 0.0
    %60 = vmatpush1.msra.mxu0 0.0
    %61 = vmatprep.subr.mxu0 0.0
    %62 = vmatpush1.msra.mxu0 0.0
    %63 = vmatprep.subr.mxu0 0.0
    %v64 = vand.u32 %v26, 4294901760
    %65 = vmatpush1.msra.mxu0 %v64
    %66 = vmatprep.subr.mxu0 0.0
    %v67 = vand.u32 %v25, 4294901760
    %68 = vmatpush1.msra.mxu0 %v67
    %69 = vmatprep.subr.mxu0 0.0
    %v70 = vand.u32 %v24, 4294901760
    %71 = vmatpush1.msra.mxu0 %v70
    %72 = vmatprep.subr.mxu0 0.0
    %v73 = vand.u32 %v23, 4294901760
    %74 = vmatpush1.msra.mxu0 %v73
    %75 = vmatprep.subr.mxu0 0.0
    %v76 = vand.u32 %v22, 4294901760
    %77 = vmatpush1.msra.mxu0 %v76
    %78 = vmatprep.subr.mxu0 0.0
    %v79 = vand.u32 %v21, 4294901760
    %80 = vmatpush1.msra.mxu0 %v79
    %81 = vmatprep.subr.mxu0 0.0
    %v82 = vand.u32 %v20, 4294901760
    %83 = vmatpush1.msra.mxu0 %v82
    %84 = vmatprep.subr.mxu0 0.0
    %v85 = vand.u32 %v19, 4294901760
    %86 = vmatpush1.msra.mxu0 %v85
    %87 = vmatprep.subr.mxu0 0.0
    %88 = vmatpush2.msra.mxu0 0.0
    %89 = vmatprep.subr.mxu0 0.0
    %90 = vmatpush2.msra.mxu0 0.0
    %91 = vmatprep.subr.mxu0 0.0
    %92 = vmatpush2.msra.mxu0 0.0
    %93 = vmatprep.subr.mxu0 0.0
    %94 = vmatpush2.msra.mxu0 0.0
    %95 = vmatprep.subr.mxu0 0.0
    %96 = vmatpush2.msra.mxu0 0.0
    %97 = vmatprep.subr.mxu0 0.0
    %98 = vmatpush2.msra.mxu0 0.0
    %99 = vmatprep.subr.mxu0 0.0
    %100 = vmatpush2.msra.mxu0 0.0
    %101 = vmatprep.subr.mxu0 0.0
    %102 = vmatpush2.msra.mxu0 0.0
    %103 = vmatprep.subr.mxu0 0.0
    %104 = vmatpush2.msra.mxu0 0.0
    %105 = vmatprep.subr.mxu0 0.0
    %106 = vmatpush2.msra.mxu0 0.0
    %107 = vmatprep.subr.mxu0 0.0
    %108 = vmatpush2.msra.mxu0 0.0
    %109 = vmatprep.subr.mxu0 0.0
    %110 = vmatpush2.msra.mxu0 0.0
    %111 = vmatprep.subr.mxu0 0.0
    %112 = vmatpush2.msra.mxu0 0.0
    %113 = vmatprep.subr.mxu0 0.0
    %114 = vmatpush2.msra.mxu0 0.0
    %115 = vmatprep.subr.mxu0 0.0
    %116 = vmatpush2.msra.mxu0 0.0
    %117 = vmatprep.subr.mxu0 0.0
    %118 = vmatpush2.msra.mxu0 0.0
    %119 = vmatprep.mubr.f32.mxu0 0.0
    %v120 = vand.u32 %v36, 4294901760
    %v121 = vsub.f32 %v36, %v120
    %v122 = vand.u32 %v121, 4294901760
    %v123 = vsub.f32 %v121, %v122
    %v124 = vand.u32 %v123, 4294901760
    %125 = vmatmul.mubr.f32.gmra.mxu0 %v124
    %v126 = vpop.f32.mrf.mxu0
    %v127 = vadd.f32 %v32, %v126
    %v128 = vpop.f32.mrf.mxu0
    %129 = vmatprep.mubr.f32.mxu0 0.0
    %v130 = vand.u32 %v39, 4294901760
    %v131 = vsub.f32 %v39, %v130
    %v132 = vand.u32 %v131, 4294901760
    %v133 = vsub.f32 %v131, %v132
    %v134 = vand.u32 %v133, 4294901760
    %135 = vmatmul.mubr.f32.gmra.mxu0 %v134
    %v136 = vpop.f32.mrf.mxu0
    %v137 = vadd.f32 %v32, %v136
    %v138 = vpop.f32.mrf.mxu0
    %139 = vmatprep.mubr.f32.mxu0 0.0
    %v140 = vand.u32 %v42, 4294901760
    %v141 = vsub.f32 %v42, %v140
    %v142 = vand.u32 %v141, 4294901760
    %v143 = vsub.f32 %v141, %v142
    %v144 = vand.u32 %v143, 4294901760
    %145 = vmatmul.mubr.f32.gmra.mxu0 %v144
    %v146 = vpop.f32.mrf.mxu0
    %v147 = vadd.f32 %v32, %v146
    %v148 = vpop.f32.mrf.mxu0
    %149 = vmatprep.mubr.f32.mxu0 0.0
    %v150 = vand.u32 %v45, 4294901760
    %v151 = vsub.f32 %v45, %v150
    %v152 = vand.u32 %v151, 4294901760
    %v153 = vsub.f32 %v151, %v152
    %v154 = vand.u32 %v153, 4294901760
    %155 = vmatmul.mubr.f32.gmra.mxu0 %v154
    %v156 = vpop.f32.mrf.mxu0
    %v157 = vadd.f32 %v32, %v156
    %v158 = vpop.f32.mrf.mxu0
    %159 = vdwg.mxu0
    %160 = vmatprep.subr.mxu0 0.0
    %161 = vmatpush1.msra.mxu0 0.0
    %162 = vmatprep.subr.mxu0 0.0
    %163 = vmatpush1.msra.mxu0 0.0
    %164 = vmatprep.subr.mxu0 0.0
    %165 = vmatpush1.msra.mxu0 0.0
    %166 = vmatprep.subr.mxu0 0.0
    %167 = vmatpush1.msra.mxu0 0.0
    %168 = vmatprep.subr.mxu0 0.0
    %169 = vmatpush1.msra.mxu0 0.0
    %170 = vmatprep.subr.mxu0 0.0
    %171 = vmatpush1.msra.mxu0 0.0
    %172 = vmatprep.subr.mxu0 0.0
    %173 = vmatpush1.msra.mxu0 0.0
    %174 = vmatprep.subr.mxu0 0.0
    %175 = vmatpush1.msra.mxu0 0.0
    %176 = vmatprep.subr.mxu0 0.0
    %v177 = vand.u32 %v26, 4294901760
    %v178 = vsub.f32 %v26, %v177
    %v179 = vand.u32 %v178, 4294901760
    %v180 = vsub.f32 %v178, %v179
    %v181 = vand.u32 %v180, 4294901760
    %182 = vmatpush1.msra.mxu0 %v181
    %183 = vmatprep.subr.mxu0 0.0
    %v184 = vand.u32 %v25, 4294901760
    %v185 = vsub.f32 %v25, %v184
    %v186 = vand.u32 %v185, 4294901760
    %v187 = vsub.f32 %v185, %v186
    %v188 = vand.u32 %v187, 4294901760
    %189 = vmatpush1.msra.mxu0 %v188
    %190 = vmatprep.subr.mxu0 0.0
    %v191 = vand.u32 %v24, 4294901760
    %v192 = vsub.f32 %v24, %v191
    %v193 = vand.u32 %v192, 4294901760
    %v194 = vsub.f32 %v192, %v193
    %v195 = vand.u32 %v194, 4294901760
    %196 = vmatpush1.msra.mxu0 %v195
    %197 = vmatprep.subr.mxu0 0.0
    %v198 = vand.u32 %v23, 4294901760
    %v199 = vsub.f32 %v23, %v198
    %v200 = vand.u32 %v199, 4294901760
    %v201 = vsub.f32 %v199, %v200
    %v202 = vand.u32 %v201, 4294901760
    %203 = vmatpush1.msra.mxu0 %v202
    %204 = vmatprep.subr.mxu0 0.0
    %v205 = vand.u32 %v22, 4294901760
    %v206 = vsub.f32 %v22, %v205
    %v207 = vand.u32 %v206, 4294901760
    %v208 = vsub.f32 %v206, %v207
    %v209 = vand.u32 %v208, 4294901760
    %210 = vmatpush1.msra.mxu0 %v209
    %211 = vmatprep.subr.mxu0 0.0
    %v212 = vand.u32 %v21, 4294901760
    %v213 = vsub.f32 %v21, %v212
    %v214 = vand.u32 %v213, 4294901760
    %v215 = vsub.f32 %v213, %v214
    %v216 = vand.u32 %v215, 4294901760
    %217 = vmatpush1.msra.mxu0 %v216
    %218 = vmatprep.subr.mxu0 0.0
    %v219 = vand.u32 %v20, 4294901760
    %v220 = vsub.f32 %v20, %v219
    %v221 = vand.u32 %v220, 4294901760
    %v222 = vsub.f32 %v220, %v221
    %v223 = vand.u32 %v222, 4294901760
    %224 = vmatpush1.msra.mxu0 %v223
    %225 = vmatprep.subr.mxu0 0.0
    %v226 = vand.u32 %v19, 4294901760
    %v227 = vsub.f32 %v19, %v226
    %v228 = vand.u32 %v227, 4294901760
    %v229 = vsub.f32 %v227, %v228
    %v230 = vand.u32 %v229, 4294901760
    %231 = vmatpush1.msra.mxu0 %v230
    %232 = vmatprep.subr.mxu0 0.0
    %233 = vmatpush2.msra.mxu0 0.0
    %234 = vmatprep.subr.mxu0 0.0
    %235 = vmatpush2.msra.mxu0 0.0
    %236 = vmatprep.subr.mxu0 0.0
    %237 = vmatpush2.msra.mxu0 0.0
    %238 = vmatprep.subr.mxu0 0.0
    %239 = vmatpush2.msra.mxu0 0.0
    %240 = vmatprep.subr.mxu0 0.0
    %241 = vmatpush2.msra.mxu0 0.0
    %242 = vmatprep.subr.mxu0 0.0
    %243 = vmatpush2.msra.mxu0 0.0
    %244 = vmatprep.subr.mxu0 0.0
    %245 = vmatpush2.msra.mxu0 0.0
    %246 = vmatprep.subr.mxu0 0.0
    %247 = vmatpush2.msra.mxu0 0.0
    %248 = vmatprep.subr.mxu0 0.0
    %249 = vmatpush2.msra.mxu0 0.0
    %250 = vmatprep.subr.mxu0 0.0
    %251 = vmatpush2.msra.mxu0 0.0
    %252 = vmatprep.subr.mxu0 0.0
    %253 = vmatpush2.msra.mxu0 0.0
    %254 = vmatprep.subr.mxu0 0.0
    %255 = vmatpush2.msra.mxu0 0.0
    %256 = vmatprep.subr.mxu0 0.0
    %257 = vmatpush2.msra.mxu0 0.0
    %258 = vmatprep.subr.mxu0 0.0
    %259 = vmatpush2.msra.mxu0 0.0
    %260 = vmatprep.subr.mxu0 0.0
    %261 = vmatpush2.msra.mxu0 0.0
    %262 = vmatprep.subr.mxu0 0.0
    %263 = vmatpush2.msra.mxu0 0.0
    %264 = vmatprep.mubr.f32.mxu0 0.0
    %v265 = vand.u32 %v36, 4294901760
    %266 = vmatmul.mubr.f32.gmra.mxu0 %v265
    %v267 = vpop.f32.mrf.mxu0
    %v268 = vadd.f32 %v127, %v267
    %v269 = vpop.f32.mrf.mxu0
    %270 = vmatprep.mubr.f32.mxu0 0.0
    %v271 = vand.u32 %v39, 4294901760
    %272 = vmatmul.mubr.f32.gmra.mxu0 %v271
    %v273 = vpop.f32.mrf.mxu0
    %v274 = vadd.f32 %v137, %v273
    %v275 = vpop.f32.mrf.mxu0
    %276 = vmatprep.mubr.f32.mxu0 0.0
    %v277 = vand.u32 %v42, 4294901760
    %278 = vmatmul.mubr.f32.gmra.mxu0 %v277
    %v279 = vpop.f32.mrf.mxu0
    %v280 = vadd.f32 %v147, %v279
    %v281 = vpop.f32.mrf.mxu0
    %282 = vmatprep.mubr.f32.mxu0 0.0
    %v283 = vand.u32 %v45, 4294901760
    %284 = vmatmul.mubr.f32.gmra.mxu0 %v283
    %v285 = vpop.f32.mrf.mxu0
    %v286 = vadd.f32 %v157, %v285
    %v287 = vpop.f32.mrf.mxu0
    %288 = vdwg.mxu0
    %289 = vmatprep.subr.mxu0 0.0
    %290 = vmatpush1.msra.mxu0 0.0
    %291 = vmatprep.subr.mxu0 0.0
    %292 = vmatpush1.msra.mxu0 0.0
    %293 = vmatprep.subr.mxu0 0.0
    %294 = vmatpush1.msra.mxu0 0.0
    %295 = vmatprep.subr.mxu0 0.0
    %296 = vmatpush1.msra.mxu0 0.0
    %297 = vmatprep.subr.mxu0 0.0
    %298 = vmatpush1.msra.mxu0 0.0
    %299 = vmatprep.subr.mxu0 0.0
    %300 = vmatpush1.msra.mxu0 0.0
    %301 = vmatprep.subr.mxu0 0.0
    %302 = vmatpush1.msra.mxu0 0.0
    %303 = vmatprep.subr.mxu0 0.0
    %304 = vmatpush1.msra.mxu0 0.0
    %305 = vmatprep.subr.mxu0 0.0
    %v306 = vand.u32 %v26, 4294901760
    %v307 = vsub.f32 %v26, %v306
    %308 = vmatpush1.msra.mxu0 %v307
    %309 = vmatprep.subr.mxu0 0.0
    %v310 = vand.u32 %v25, 4294901760
    %v311 = vsub.f32 %v25, %v310
    %312 = vmatpush1.msra.mxu0 %v311
    %313 = vmatprep.subr.mxu0 0.0
    %v314 = vand.u32 %v24, 4294901760
    %v315 = vsub.f32 %v24, %v314
    %316 = vmatpush1.msra.mxu0 %v315
    %317 = vmatprep.subr.mxu0 0.0
    %v318 = vand.u32 %v23, 4294901760
    %v319 = vsub.f32 %v23, %v318
    %320 = vmatpush1.msra.mxu0 %v319
    %321 = vmatprep.subr.mxu0 0.0
    %v322 = vand.u32 %v22, 4294901760
    %v323 = vsub.f32 %v22, %v322
    %324 = vmatpush1.msra.mxu0 %v323
    %325 = vmatprep.subr.mxu0 0.0
    %v326 = vand.u32 %v21, 4294901760
    %v327 = vsub.f32 %v21, %v326
    %328 = vmatpush1.msra.mxu0 %v327
    %329 = vmatprep.subr.mxu0 0.0
    %v330 = vand.u32 %v20, 4294901760
    %v331 = vsub.f32 %v20, %v330
    %332 = vmatpush1.msra.mxu0 %v331
    %333 = vmatprep.subr.mxu0 0.0
    %v334 = vand.u32 %v19, 4294901760
    %v335 = vsub.f32 %v19, %v334
    %336 = vmatpush1.msra.mxu0 %v335
    %337 = vmatprep.subr.mxu0 0.0
    %338 = vmatpush2.msra.mxu0 0.0
    %339 = vmatprep.subr.mxu0 0.0
    %340 = vmatpush2.msra.mxu0 0.0
    %341 = vmatprep.subr.mxu0 0.0
    %342 = vmatpush2.msra.mxu0 0.0
    %343 = vmatprep.subr.mxu0 0.0
    %344 = vmatpush2.msra.mxu0 0.0
    %345 = vmatprep.subr.mxu0 0.0
    %346 = vmatpush2.msra.mxu0 0.0
    %347 = vmatprep.subr.mxu0 0.0
    %348 = vmatpush2.msra.mxu0 0.0
    %349 = vmatprep.subr.mxu0 0.0
    %350 = vmatpush2.msra.mxu0 0.0
    %351 = vmatprep.subr.mxu0 0.0
    %352 = vmatpush2.msra.mxu0 0.0
    %353 = vmatprep.subr.mxu0 0.0
    %354 = vmatpush2.msra.mxu0 0.0
    %355 = vmatprep.subr.mxu0 0.0
    %356 = vmatpush2.msra.mxu0 0.0
    %357 = vmatprep.subr.mxu0 0.0
    %358 = vmatpush2.msra.mxu0 0.0
    %359 = vmatprep.subr.mxu0 0.0
    %360 = vmatpush2.msra.mxu0 0.0
    %361 = vmatprep.subr.mxu0 0.0
    %362 = vmatpush2.msra.mxu0 0.0
    %363 = vmatprep.subr.mxu0 0.0
    %364 = vmatpush2.msra.mxu0 0.0
    %365 = vmatprep.subr.mxu0 0.0
    %366 = vmatpush2.msra.mxu0 0.0
    %367 = vmatprep.subr.mxu0 0.0
    %368 = vmatpush2.msra.mxu0 0.0
    %369 = vmatprep.mubr.f32.mxu0 0.0
    %v370 = vand.u32 %v36, 4294901760
    %v371 = vsub.f32 %v36, %v370
    %372 = vmatmul.mubr.f32.gmra.mxu0 %v371
    %v373 = vpop.f32.mrf.mxu0
    %v374 = vadd.f32 %v268, %v373
    %v375 = vpop.f32.mrf.mxu0
    %376 = vmatprep.mubr.f32.mxu0 0.0
    %v377 = vand.u32 %v39, 4294901760
    %v378 = vsub.f32 %v39, %v377
    %379 = vmatmul.mubr.f32.gmra.mxu0 %v378
    %v380 = vpop.f32.mrf.mxu0
    %v381 = vadd.f32 %v274, %v380
    %v382 = vpop.f32.mrf.mxu0
    %383 = vmatprep.mubr.f32.mxu0 0.0
    %v384 = vand.u32 %v42, 4294901760
    %v385 = vsub.f32 %v42, %v384
    %386 = vmatmul.mubr.f32.gmra.mxu0 %v385
    %v387 = vpop.f32.mrf.mxu0
    %v388 = vadd.f32 %v280, %v387
    %v389 = vpop.f32.mrf.mxu0
    %390 = vmatprep.mubr.f32.mxu0 0.0
    %v391 = vand.u32 %v45, 4294901760
    %v392 = vsub.f32 %v45, %v391
    %393 = vmatmul.mubr.f32.gmra.mxu0 %v392
    %v394 = vpop.f32.mrf.mxu0
    %v395 = vadd.f32 %v286, %v394
    %v396 = vpop.f32.mrf.mxu0
    %397 = vdwg.mxu0
    %398 = vmatprep.subr.mxu0 0.0
    %399 = vmatpush1.msra.mxu0 0.0
    %400 = vmatprep.subr.mxu0 0.0
    %401 = vmatpush1.msra.mxu0 0.0
    %402 = vmatprep.subr.mxu0 0.0
    %403 = vmatpush1.msra.mxu0 0.0
    %404 = vmatprep.subr.mxu0 0.0
    %405 = vmatpush1.msra.mxu0 0.0
    %406 = vmatprep.subr.mxu0 0.0
    %407 = vmatpush1.msra.mxu0 0.0
    %408 = vmatprep.subr.mxu0 0.0
    %409 = vmatpush1.msra.mxu0 0.0
    %410 = vmatprep.subr.mxu0 0.0
    %411 = vmatpush1.msra.mxu0 0.0
    %412 = vmatprep.subr.mxu0 0.0
    %413 = vmatpush1.msra.mxu0 0.0
    %414 = vmatprep.subr.mxu0 0.0
    %v415 = vand.u32 %v26, 4294901760
    %416 = vmatpush1.msra.mxu0 %v415
    %417 = vmatprep.subr.mxu0 0.0
    %v418 = vand.u32 %v25, 4294901760
    %419 = vmatpush1.msra.mxu0 %v418
    %420 = vmatprep.subr.mxu0 0.0
    %v421 = vand.u32 %v24, 4294901760
    %422 = vmatpush1.msra.mxu0 %v421
    %423 = vmatprep.subr.mxu0 0.0
    %v424 = vand.u32 %v23, 4294901760
    %425 = vmatpush1.msra.mxu0 %v424
    %426 = vmatprep.subr.mxu0 0.0
    %v427 = vand.u32 %v22, 4294901760
    %428 = vmatpush1.msra.mxu0 %v427
    %429 = vmatprep.subr.mxu0 0.0
    %v430 = vand.u32 %v21, 4294901760
    %431 = vmatpush1.msra.mxu0 %v430
    %432 = vmatprep.subr.mxu0 0.0
    %v433 = vand.u32 %v20, 4294901760
    %434 = vmatpush1.msra.mxu0 %v433
    %435 = vmatprep.subr.mxu0 0.0
    %v436 = vand.u32 %v19, 4294901760
    %437 = vmatpush1.msra.mxu0 %v436
    %438 = vmatprep.subr.mxu0 0.0
    %439 = vmatpush2.msra.mxu0 0.0
    %440 = vmatprep.subr.mxu0 0.0
    %441 = vmatpush2.msra.mxu0 0.0
    %442 = vmatprep.subr.mxu0 0.0
    %443 = vmatpush2.msra.mxu0 0.0
    %444 = vmatprep.subr.mxu0 0.0
    %445 = vmatpush2.msra.mxu0 0.0
    %446 = vmatprep.subr.mxu0 0.0
    %447 = vmatpush2.msra.mxu0 0.0
    %448 = vmatprep.subr.mxu0 0.0
    %449 = vmatpush2.msra.mxu0 0.0
    %450 = vmatprep.subr.mxu0 0.0
    %451 = vmatpush2.msra.mxu0 0.0
    %452 = vmatprep.subr.mxu0 0.0
    %453 = vmatpush2.msra.mxu0 0.0
    %454 = vmatprep.subr.mxu0 0.0
    %455 = vmatpush2.msra.mxu0 0.0
    %456 = vmatprep.subr.mxu0 0.0
    %457 = vmatpush2.msra.mxu0 0.0
    %458 = vmatprep.subr.mxu0 0.0
    %459 = vmatpush2.msra.mxu0 0.0
    %460 = vmatprep.subr.mxu0 0.0
    %461 = vmatpush2.msra.mxu0 0.0
    %462 = vmatprep.subr.mxu0 0.0
    %463 = vmatpush2.msra.mxu0 0.0
    %464 = vmatprep.subr.mxu0 0.0
    %465 = vmatpush2.msra.mxu0 0.0
    %466 = vmatprep.subr.mxu0 0.0
    %467 = vmatpush2.msra.mxu0 0.0
    %468 = vmatprep.subr.mxu0 0.0
    %469 = vmatpush2.msra.mxu0 0.0
    %470 = vmatprep.mubr.f32.mxu0 0.0
    %v471 = vand.u32 %v36, 4294901760
    %v472 = vsub.f32 %v36, %v471
    %v473 = vand.u32 %v472, 4294901760
    %474 = vmatmul.mubr.f32.gmra.mxu0 %v473
    %v475 = vpop.f32.mrf.mxu0
    %v476 = vadd.f32 %v374, %v475
    %v477 = vpop.f32.mrf.mxu0
    %478 = vmatprep.mubr.f32.mxu0 0.0
    %v479 = vand.u32 %v39, 4294901760
    %v480 = vsub.f32 %v39, %v479
    %v481 = vand.u32 %v480, 4294901760
    %482 = vmatmul.mubr.f32.gmra.mxu0 %v481
    %v483 = vpop.f32.mrf.mxu0
    %v484 = vadd.f32 %v381, %v483
    %v485 = vpop.f32.mrf.mxu0
    %486 = vmatprep.mubr.f32.mxu0 0.0
    %v487 = vand.u32 %v42, 4294901760
    %v488 = vsub.f32 %v42, %v487
    %v489 = vand.u32 %v488, 4294901760
    %490 = vmatmul.mubr.f32.gmra.mxu0 %v489
    %v491 = vpop.f32.mrf.mxu0
    %v492 = vadd.f32 %v388, %v491
    %v493 = vpop.f32.mrf.mxu0
    %494 = vmatprep.mubr.f32.mxu0 0.0
    %v495 = vand.u32 %v45, 4294901760
    %v496 = vsub.f32 %v45, %v495
    %v497 = vand.u32 %v496, 4294901760
    %498 = vmatmul.mubr.f32.gmra.mxu0 %v497
    %v499 = vpop.f32.mrf.mxu0
    %v500 = vadd.f32 %v395, %v499
    %v501 = vpop.f32.mrf.mxu0
    %502 = vdwg.mxu0
    %503 = vmatprep.subr.mxu0 0.0
    %504 = vmatpush1.msra.mxu0 0.0
    %505 = vmatprep.subr.mxu0 0.0
    %506 = vmatpush1.msra.mxu0 0.0
    %507 = vmatprep.subr.mxu0 0.0
    %508 = vmatpush1.msra.mxu0 0.0
    %509 = vmatprep.subr.mxu0 0.0
    %510 = vmatpush1.msra.mxu0 0.0
    %511 = vmatprep.subr.mxu0 0.0
    %512 = vmatpush1.msra.mxu0 0.0
    %513 = vmatprep.subr.mxu0 0.0
    %514 = vmatpush1.msra.mxu0 0.0
    %515 = vmatprep.subr.mxu0 0.0
    %516 = vmatpush1.msra.mxu0 0.0
    %517 = vmatprep.subr.mxu0 0.0
    %518 = vmatpush1.msra.mxu0 0.0
    %519 = vmatprep.subr.mxu0 0.0
    %v520 = vand.u32 %v26, 4294901760
    %v521 = vsub.f32 %v26, %v520
    %v522 = vand.u32 %v521, 4294901760
    %523 = vmatpush1.msra.mxu0 %v522
    %524 = vmatprep.subr.mxu0 0.0
    %v525 = vand.u32 %v25, 4294901760
    %v526 = vsub.f32 %v25, %v525
    %v527 = vand.u32 %v526, 4294901760
    %528 = vmatpush1.msra.mxu0 %v527
    %529 = vmatprep.subr.mxu0 0.0
    %v530 = vand.u32 %v24, 4294901760
    %v531 = vsub.f32 %v24, %v530
    %v532 = vand.u32 %v531, 4294901760
    %533 = vmatpush1.msra.mxu0 %v532
    %534 = vmatprep.subr.mxu0 0.0
    %v535 = vand.u32 %v23, 4294901760
    %v536 = vsub.f32 %v23, %v535
    %v537 = vand.u32 %v536, 4294901760
    %538 = vmatpush1.msra.mxu0 %v537
    %539 = vmatprep.subr.mxu0 0.0
    %v540 = vand.u32 %v22, 4294901760
    %v541 = vsub.f32 %v22, %v540
    %v542 = vand.u32 %v541, 4294901760
    %543 = vmatpush1.msra.mxu0 %v542
    %544 = vmatprep.subr.mxu0 0.0
    %v545 = vand.u32 %v21, 4294901760
    %v546 = vsub.f32 %v21, %v545
    %v547 = vand.u32 %v546, 4294901760
    %548 = vmatpush1.msra.mxu0 %v547
    %549 = vmatprep.subr.mxu0 0.0
    %v550 = vand.u32 %v20, 4294901760
    %v551 = vsub.f32 %v20, %v550
    %v552 = vand.u32 %v551, 4294901760
    %553 = vmatpush1.msra.mxu0 %v552
    %554 = vmatprep.subr.mxu0 0.0
    %v555 = vand.u32 %v19, 4294901760
    %v556 = vsub.f32 %v19, %v555
    %v557 = vand.u32 %v556, 4294901760
    %558 = vmatpush1.msra.mxu0 %v557
    %559 = vmatprep.subr.mxu0 0.0
    %560 = vmatpush2.msra.mxu0 0.0
    %561 = vmatprep.subr.mxu0 0.0
    %562 = vmatpush2.msra.mxu0 0.0
    %563 = vmatprep.subr.mxu0 0.0
    %564 = vmatpush2.msra.mxu0 0.0
    %565 = vmatprep.subr.mxu0 0.0
    %566 = vmatpush2.msra.mxu0 0.0
    %567 = vmatprep.subr.mxu0 0.0
    %568 = vmatpush2.msra.mxu0 0.0
    %569 = vmatprep.subr.mxu0 0.0
    %570 = vmatpush2.msra.mxu0 0.0
    %571 = vmatprep.subr.mxu0 0.0
    %572 = vmatpush2.msra.mxu0 0.0
    %573 = vmatprep.subr.mxu0 0.0
    %574 = vmatpush2.msra.mxu0 0.0
    %575 = vmatprep.subr.mxu0 0.0
    %576 = vmatpush2.msra.mxu0 0.0
    %577 = vmatprep.subr.mxu0 0.0
    %578 = vmatpush2.msra.mxu0 0.0
    %579 = vmatprep.subr.mxu0 0.0
    %580 = vmatpush2.msra.mxu0 0.0
    %581 = vmatprep.subr.mxu0 0.0
    %582 = vmatpush2.msra.mxu0 0.0
    %583 = vmatprep.subr.mxu0 0.0
    %584 = vmatpush2.msra.mxu0 0.0
    %585 = vmatprep.subr.mxu0 0.0
    %586 = vmatpush2.msra.mxu0 0.0
    %587 = vmatprep.subr.mxu0 0.0
    %588 = vmatpush2.msra.mxu0 0.0
    %589 = vmatprep.subr.mxu0 0.0
    %590 = vmatpush2.msra.mxu0 0.0
    %591 = vmatprep.mubr.f32.mxu0 0.0
    %v592 = vand.u32 %v36, 4294901760
    %593 = vmatmul.mubr.f32.gmra.mxu0 %v592
    %v594 = vpop.f32.mrf.mxu0
    %v595 = vadd.f32 %v476, %v594
    %v596 = vpop.f32.mrf.mxu0
    %597 = vmatprep.mubr.f32.mxu0 0.0
    %v598 = vand.u32 %v39, 4294901760
    %599 = vmatmul.mubr.f32.gmra.mxu0 %v598
    %v600 = vpop.f32.mrf.mxu0
    %v601 = vadd.f32 %v484, %v600
    %v602 = vpop.f32.mrf.mxu0
    %603 = vmatprep.mubr.f32.mxu0 0.0
    %v604 = vand.u32 %v42, 4294901760
    %605 = vmatmul.mubr.f32.gmra.mxu0 %v604
    %v606 = vpop.f32.mrf.mxu0
    %v607 = vadd.f32 %v492, %v606
    %v608 = vpop.f32.mrf.mxu0
    %609 = vmatprep.mubr.f32.mxu0 0.0
    %v610 = vand.u32 %v45, 4294901760
    %611 = vmatmul.mubr.f32.gmra.mxu0 %v610
    %v612 = vpop.f32.mrf.mxu0
    %v613 = vadd.f32 %v500, %v612
    %v614 = vpop.f32.mrf.mxu0
    %615 = vdwg.mxu0
    %616 = vmatprep.subr.mxu0 0.0
    %617 = vmatpush1.msra.mxu0 0.0
    %618 = vmatprep.subr.mxu0 0.0
    %619 = vmatpush1.msra.mxu0 0.0
    %620 = vmatprep.subr.mxu0 0.0
    %621 = vmatpush1.msra.mxu0 0.0
    %622 = vmatprep.subr.mxu0 0.0
    %623 = vmatpush1.msra.mxu0 0.0
    %624 = vmatprep.subr.mxu0 0.0
    %625 = vmatpush1.msra.mxu0 0.0
    %626 = vmatprep.subr.mxu0 0.0
    %627 = vmatpush1.msra.mxu0 0.0
    %628 = vmatprep.subr.mxu0 0.0
    %629 = vmatpush1.msra.mxu0 0.0
    %630 = vmatprep.subr.mxu0 0.0
    %631 = vmatpush1.msra.mxu0 0.0
    %632 = vmatprep.subr.mxu0 0.0
    %v633 = vand.u32 %v26, 4294901760
    %634 = vmatpush1.msra.mxu0 %v633
    %635 = vmatprep.subr.mxu0 0.0
    %v636 = vand.u32 %v25, 4294901760
    %637 = vmatpush1.msra.mxu0 %v636
    %638 = vmatprep.subr.mxu0 0.0
    %v639 = vand.u32 %v24, 4294901760
    %640 = vmatpush1.msra.mxu0 %v639
    %641 = vmatprep.subr.mxu0 0.0
    %v642 = vand.u32 %v23, 4294901760
    %643 = vmatpush1.msra.mxu0 %v642
    %644 = vmatprep.subr.mxu0 0.0
    %v645 = vand.u32 %v22, 4294901760
    %646 = vmatpush1.msra.mxu0 %v645
    %647 = vmatprep.subr.mxu0 0.0
    %v648 = vand.u32 %v21, 4294901760
    %649 = vmatpush1.msra.mxu0 %v648
    %650 = vmatprep.subr.mxu0 0.0
    %v651 = vand.u32 %v20, 4294901760
    %652 = vmatpush1.msra.mxu0 %v651
    %653 = vmatprep.subr.mxu0 0.0
    %v654 = vand.u32 %v19, 4294901760
    %655 = vmatpush1.msra.mxu0 %v654
    %656 = vmatprep.subr.mxu0 0.0
    %657 = vmatpush2.msra.mxu0 0.0
    %658 = vmatprep.subr.mxu0 0.0
    %659 = vmatpush2.msra.mxu0 0.0
    %660 = vmatprep.subr.mxu0 0.0
    %661 = vmatpush2.msra.mxu0 0.0
    %662 = vmatprep.subr.mxu0 0.0
    %663 = vmatpush2.msra.mxu0 0.0
    %664 = vmatprep.subr.mxu0 0.0
    %665 = vmatpush2.msra.mxu0 0.0
    %666 = vmatprep.subr.mxu0 0.0
    %667 = vmatpush2.msra.mxu0 0.0
    %668 = vmatprep.subr.mxu0 0.0
    %669 = vmatpush2.msra.mxu0 0.0
    %670 = vmatprep.subr.mxu0 0.0
    %671 = vmatpush2.msra.mxu0 0.0
    %672 = vmatprep.subr.mxu0 0.0
    %673 = vmatpush2.msra.mxu0 0.0
    %674 = vmatprep.subr.mxu0 0.0
    %675 = vmatpush2.msra.mxu0 0.0
    %676 = vmatprep.subr.mxu0 0.0
    %677 = vmatpush2.msra.mxu0 0.0
    %678 = vmatprep.subr.mxu0 0.0
    %679 = vmatpush2.msra.mxu0 0.0
    %680 = vmatprep.subr.mxu0 0.0
    %681 = vmatpush2.msra.mxu0 0.0
    %682 = vmatprep.subr.mxu0 0.0
    %683 = vmatpush2.msra.mxu0 0.0
    %684 = vmatprep.subr.mxu0 0.0
    %685 = vmatpush2.msra.mxu0 0.0
    %686 = vmatprep.subr.mxu0 0.0
    %687 = vmatpush2.msra.mxu0 0.0
    %688 = vmatprep.mubr.f32.mxu0 0.0
    %v689 = vand.u32 %v36, 4294901760
    %690 = vmatmul.mubr.f32.gmra.mxu0 %v689
    %v691 = vpop.f32.mrf.mxu0
    %v692 = vadd.f32 %v595, %v691
    %v693 = vpop.f32.mrf.mxu0
    %694 = vmatprep.mubr.f32.mxu0 0.0
    %v695 = vand.u32 %v39, 4294901760
    %696 = vmatmul.mubr.f32.gmra.mxu0 %v695
    %v697 = vpop.f32.mrf.mxu0
    %v698 = vadd.f32 %v601, %v697
    %v699 = vpop.f32.mrf.mxu0
    %700 = vmatprep.mubr.f32.mxu0 0.0
    %v701 = vand.u32 %v42, 4294901760
    %702 = vmatmul.mubr.f32.gmra.mxu0 %v701
    %v703 = vpop.f32.mrf.mxu0
    %v704 = vadd.f32 %v607, %v703
    %v705 = vpop.f32.mrf.mxu0
    %706 = vmatprep.mubr.f32.mxu0 0.0
    %v707 = vand.u32 %v45, 4294901760
    %708 = vmatmul.mubr.f32.gmra.mxu0 %v707
    %v709 = vpop.f32.mrf.mxu0
    %v710 = vadd.f32 %v613, %v709
    %v711 = vpop.f32.mrf.mxu0
    %712 = vdwg.mxu0
    %713 = vst [vmem:[#allocation2] sm:$0xff] %v692
    %714 = vst [vmem:[#allocation2 + $0x8] sm:$0xff] %v698
    %715 = vst [vmem:[#allocation2 + $0x10] sm:$0xff] %v704
    %716 = vst [vmem:[#allocation2 + $0x18] sm:$0xff] %v710
    // Predicated region
    $region14: #{patch_embedding.1} parent=1 // pred_check
      _
    $region15: #{patch_embedding.1} parent=1 // pred_check_branch
      %718 = sbr.rel (0) target = $region17
    $region16: #{patch_embedding.1} parent=1 // pred_region
      %s720 = ssub.s32 512, 512
      %721 = vsyncadd [#allocation3], %s720
      %s722 = sshll.u32 [#allocation2], 4
      %s723 = int_to_ptr.vmem [resolvable:$true] %s722
      %728 = dma.vmem_to_hbm [thread:$0]  %s723, 512, %s3, [#allocation3], 128, 128, 8
    $region17: #{patch_embedding.1} parent=1 // pred_fallthru
      _
    // Predicated region
    $region18: #{patch_embedding.1} parent=1 // pred_check
      _
    $region19: #{patch_embedding.1} parent=1 // pred_check_branch
      %730 = sbr.rel (0) target = $region21
    $region20: #{patch_embedding.1} parent=1 // pred_region
      %731 = dma.done [#allocation3], 512
    $region21: #{patch_embedding.1} parent=1 // pred_fallthru
      _
    %732 = vsyncpa [#allocation3], 1

</llo_original>
